<compile_context>
chip_gen: v7x
topology: tpu7x:2x2x1
jax: 0.10.0
libtpu: 0.0.40
codegen_flags: <defaults>
</compile_context>

<pallas_src>
import functools

import jax
import jax.numpy as jnp
from jax.experimental import pallas as pl
from jax.experimental.pallas import tpu as pltpu


def _reference_loss(inp2d, tgt2d):
    """Pure-JAX reference / small-input fallback (XLA fuses this)."""
    mask = (tgt2d != -100.0).astype(jnp.float32)
    err = jnp.abs(inp2d - tgt2d) * mask
    return jnp.mean(jnp.sum(err, axis=-1) / jnp.sum(mask, axis=-1))


def _suffix_mae_kernel(inp_ref, tgt_ref, out_ref, sum_acc, cnt_acc, *,
                       w_total, w_tile, ragged_w):
    # inp_ref, tgt_ref : (B_tile, W_tile) f32 in VMEM
    # out_ref          : (B_tile, 1) f32 in VMEM (per-instance MAE)
    # sum_acc, cnt_acc : (B_tile, 1) f32 VMEM scratch, resident across j
    j = pl.program_id(1)

    @pl.when(j == 0)
    def _init():
        sum_acc[...] = jnp.zeros_like(sum_acc)
        cnt_acc[...] = jnp.zeros_like(cnt_acc)

    inp = inp_ref[...]
    tgt = tgt_ref[...]

    valid = tgt != -100.0
    if ragged_w:
        # Mask the ragged last window tile: block padding beyond the array
        # extent contains garbage, so gate on the global column index.
        col = jax.lax.broadcasted_iota(jnp.int32, inp.shape, 1) + j * w_tile
        valid = jnp.logical_and(valid, col < w_total)

    # jnp.where (not mul-by-mask) so garbage/NaN padding never contaminates
    # the row sums of real rows.
    err = jnp.where(valid, jnp.abs(inp - tgt), 0.0)

    sum_acc[...] += jnp.sum(err, axis=-1, keepdims=True)
    cnt_acc[...] += jnp.sum(valid.astype(jnp.float32), axis=-1, keepdims=True)

    @pl.when(j == pl.num_programs(1) - 1)
    def _finalize():
        out_ref[...] = sum_acc[...] / cnt_acc[...]


def _pick_tile(dim, requested, align):
    """Largest legal tile <= requested: multiple of `align`, or the full dim."""
    if requested >= dim:
        return dim
    t = max(align, (requested // align) * align)
    return dim if t >= dim else t


def suffix_length_normalized_mae_loss(inputs, targets, *,
                                      b_tile=256, w_tile=1024,
                                      use_pallas=None,
                                      min_pallas_bytes=1 << 18):
    """inputs, targets: (batch, window, 1) float32. Returns scalar float32."""
    assert inputs.shape == targets.shape
    assert inputs.shape[-1] == 1
    assert inputs.dtype == jnp.float32 and targets.dtype == jnp.float32
    B, W, _ = inputs.shape

    # Zero-copy reshape (equivalent to [:, :, 0] since last dim == 1).
    inp2d = jnp.reshape(inputs, (B, W))
    tgt2d = jnp.reshape(targets, (B, W))

    total_bytes = 2 * B * W * 4
    if use_pallas is None:
        use_pallas = total_bytes >= min_pallas_bytes
    if not use_pallas:
        # Tiny input: dispatch overhead would dominate; let XLA fuse it.
        return _reference_loss(inp2d, tgt2d)

    B_tile = _pick_tile(B, b_tile, 8)     # sublane axis: multiple of 8 or full
    W_tile = _pick_tile(W, w_tile, 128)   # lane axis: multiple of 128 or full
    grid_b = pl.cdiv(B, B_tile)
    grid_w = pl.cdiv(W, W_tile)
    ragged_w = (grid_w * W_tile) != W

    kernel = functools.partial(_suffix_mae_kernel,
                               w_total=W, w_tile=W_tile, ragged_w=ragged_w)

    # ~ 2 inputs x 2 pipeline buffers x tile + accumulators + slack.
    vmem_est = 4 * B_tile * W_tile * 4 + (1 << 20)

    per_row = pl.pallas_call(
        kernel,
        out_shape=jax.ShapeDtypeStruct((B, 1), jnp.float32),
        grid_spec=pltpu.PrefetchScalarGridSpec(
            num_scalar_prefetch=0,
            grid=(grid_b, grid_w),
            in_specs=[
                pl.BlockSpec((B_tile, W_tile), lambda i, j: (i, j)),
                pl.BlockSpec((B_tile, W_tile), lambda i, j: (i, j)),
            ],
            out_specs=pl.BlockSpec((B_tile, 1), lambda i, j: (i, 0)),
            scratch_shapes=[
                pltpu.VMEM((B_tile, 1), jnp.float32),
                pltpu.VMEM((B_tile, 1), jnp.float32),
            ],
        ),
        compiler_params=pltpu.CompilerParams(
            dimension_semantics=("parallel", "arbitrary"),
            vmem_limit_bytes=max(vmem_est, 16 * 1024 * 1024),
        ),
    )(inp2d, tgt2d)

    # Final tiny batch mean over (B, 1) per-instance MAEs in the wrapper.
    return jnp.mean(per_row)


def _make_example(key, B, W):
    k_in, k_tgt, k_len = jax.random.split(key, 3)
    inputs = jax.random.normal(k_in, (B, W, 1), dtype=jnp.float32)
    targets = jax.random.normal(k_tgt, (B, W, 1), dtype=jnp.float32)
    # Suffixes of varying (>= 1) valid length; the rest padded with -100.0.
    valid_lens = jax.random.randint(k_len, (B,), 1, W + 1)
    pos = jnp.arange(W)[None, :, None]
    targets = jnp.where(pos >= valid_lens[:, None, None],
                        jnp.float32(-100.0), targets)
    return inputs, targets


if __name__ == "__main__":
    key = jax.random.PRNGKey(0)
    k1, k2 = jax.random.split(key)

    # --- Case 1: multi-tile grid (3 x 3) with a ragged last window tile -----
    B1, W1 = 24, 320
    inputs1, targets1 = _make_example(k1, B1, W1)
    loss1 = suffix_length_normalized_mae_loss(
        inputs1, targets1, b_tile=8, w_tile=128, use_pallas=True)
    loss1 = jax.block_until_ready(loss1)
    ref1 = _reference_loss(jnp.reshape(inputs1, (B1, W1)),
                           jnp.reshape(targets1, (B1, W1)))
    assert jnp.allclose(loss1, ref1, rtol=1e-5, atol=1e-6), (loss1, ref1)

    # --- Case 2: tiny docstring-like shape, forced through the kernel -------
    B2, W2 = 4, 16
    inputs2, targets2 = _make_example(k2, B2, W2)
    loss2 = suffix_length_normalized_mae_loss(inputs2, targets2,
                                              use_pallas=True)
    loss2 = jax.block_until_ready(loss2)
    ref2 = _reference_loss(jnp.reshape(inputs2, (B2, W2)),
                           jnp.reshape(targets2, (B2, W2)))
    assert jnp.allclose(loss2, ref2, rtol=1e-5, atol=1e-6), (loss2, ref2)

    # --- Case 3: same tiny shape via auto-dispatch (falls back to fused XLA) -
    loss3 = suffix_length_normalized_mae_loss(inputs2, targets2)
    loss3 = jax.block_until_ready(loss3)
    assert jnp.allclose(loss3, ref2, rtol=1e-6, atol=1e-6), (loss3, ref2)

    print("KERNEL_OK")
</pallas_src>

<mosaic_0001>
module attributes {stable_mosaic.version = 11 : i64} {
  func.func @_suffix_mae_kernel(%arg0: i32, %arg1: i32, %arg2: memref<8x128xf32, #tpu.memory_space<vmem>>, %arg3: memref<8x128xf32, #tpu.memory_space<vmem>>, %arg4: memref<8x1xf32, #tpu.memory_space<vmem>>, %arg5: memref<8x1xf32, #tpu.memory_space<vmem>>, %arg6: memref<8x1xf32, #tpu.memory_space<vmem>>) attributes {dimension_semantics = [#tpu.dimension_semantics<parallel>, #tpu.dimension_semantics<arbitrary>], iteration_bounds = array<i64: 3, 3>, scalar_prefetch = 0 : i64, scratch_operands = 2 : i64, tpu.core_type = #tpu.core_type<tc>, window_params = [{transform_indices = @transform_0, window_bounds = array<i64: 8, 128>}, {transform_indices = @transform_1, window_bounds = array<i64: 8, 128>}, {transform_indices = @transform_2, window_bounds = array<i64: 8, 1>}]} {
    %c0_i32 = arith.constant 0 : i32
    %0 = arith.cmpi eq, %arg1, %c0_i32 : i32
    %1 = arith.extui %0 : i1 to i32
    %c0_i32_0 = arith.constant 0 : i32
    %2 = arith.cmpi ne, %1, %c0_i32_0 : i32
    scf.if %2 {
      %cst_16 = arith.constant 0.000000e+00 : f32
      %33 = vector.broadcast %cst_16 : f32 to vector<8x1xf32>
      %c0_17 = arith.constant 0 : index
      %c0_18 = arith.constant 0 : index
      %34 = vector.load %arg5[%c0_17, %c0_18] : memref<8x1xf32, #tpu.memory_space<vmem>>, vector<8x1xf32>
      tpu.vector_store %arg5[%c0_17, %c0_18], %33 {strides = array<i32>} : memref<8x1xf32, #tpu.memory_space<vmem>>, vector<8x1xf32>,
      %cst_19 = arith.constant 0.000000e+00 : f32
      %35 = vector.broadcast %cst_19 : f32 to vector<8x1xf32>
      %c0_20 = arith.constant 0 : index
      %c0_21 = arith.constant 0 : index
      %36 = vector.load %arg6[%c0_20, %c0_21] : memref<8x1xf32, #tpu.memory_space<vmem>>, vector<8x1xf32>
      tpu.vector_store %arg6[%c0_20, %c0_21], %35 {strides = array<i32>} : memref<8x1xf32, #tpu.memory_space<vmem>>, vector<8x1xf32>,
    } else {
    }
    %c0 = arith.constant 0 : index
    %c0_1 = arith.constant 0 : index
    %3 = vector.load %arg2[%c0, %c0_1] : memref<8x128xf32, #tpu.memory_space<vmem>>, vector<8x128xf32>
    %c0_2 = arith.constant 0 : index
    %c0_3 = arith.constant 0 : index
    %4 = vector.load %arg3[%c0_2, %c0_3] : memref<8x128xf32, #tpu.memory_space<vmem>>, vector<8x128xf32>
    %cst = arith.constant -1.000000e+02 : f32
    %5 = vector.broadcast %cst : f32 to vector<8x128xf32>
    %6 = arith.cmpf one, %4, %5 : vector<8x128xf32>
    %7 = tpu.iota {dimensions = array<i32: 1>} : vector<8x128xi32>
    %c128_i32 = arith.constant 128 : i32
    %8 = arith.muli %arg1, %c128_i32 : i32
    %9 = vector.broadcast %8 : i32 to vector<8x128xi32>
    %10 = arith.addi %7, %9 : vector<8x128xi32>
    %c320_i32 = arith.constant 320 : i32
    %11 = vector.broadcast %c320_i32 : i32 to vector<8x128xi32>
    %12 = arith.cmpi slt, %10, %11 : vector<8x128xi32>
    %13 = arith.andi %6, %12 : vector<8x128xi1>
    %14 = arith.subf %3, %4 : vector<8x128xf32>
    %15 = math.absf %14 : vector<8x128xf32>
    %cst_4 = arith.constant 0.000000e+00 : f32
    %16 = vector.broadcast %cst_4 : f32 to vector<8x128xf32>
    %17 = arith.select %13, %15, %16 : vector<8x128xi1>, vector<8x128xf32>
    %c0_5 = arith.constant 0 : index
    %c0_6 = arith.constant 0 : index
    %18 = vector.load %arg5[%c0_5, %c0_6] : memref<8x1xf32, #tpu.memory_space<vmem>>, vector<8x1xf32>
    %cst_7 = arith.constant dense<0.000000e+00> : vector<8xf32>
    %19 = vector.multi_reduction <add>, %17, %cst_7 [1] : vector<8x128xf32> to vector<8xf32>
    %20 = vector.shape_cast %19 : vector<8xf32> to vector<8x1xf32>
    %21 = arith.addf %18, %20 : vector<8x1xf32>
    %c0_8 = arith.constant 0 : index
    %c0_9 = arith.constant 0 : index
    %22 = vector.load %arg5[%c0_8, %c0_9] : memref<8x1xf32, #tpu.memory_space<vmem>>, vector<8x1xf32>
    tpu.vector_store %arg5[%c0_8, %c0_9], %21 {strides = array<i32>} : memref<8x1xf32, #tpu.memory_space<vmem>>, vector<8x1xf32>,
    %c0_10 = arith.constant 0 : index
    %c0_11 = arith.constant 0 : index
    %23 = vector.load %arg6[%c0_10, %c0_11] : memref<8x1xf32, #tpu.memory_space<vmem>>, vector<8x1xf32>
    %24 = arith.extui %13 : vector<8x128xi1> to vector<8x128xi32>
    %25 = arith.sitofp %24 : vector<8x128xi32> to vector<8x128xf32>
    %cst_12 = arith.constant dense<0.000000e+00> : vector<8xf32>
    %26 = vector.multi_reduction <add>, %25, %cst_12 [1] : vector<8x128xf32> to vector<8xf32>
    %27 = vector.shape_cast %26 : vector<8xf32> to vector<8x1xf32>
    %28 = arith.addf %23, %27 : vector<8x1xf32>
    %c0_13 = arith.constant 0 : index
    %c0_14 = arith.constant 0 : index
    %29 = vector.load %arg6[%c0_13, %c0_14] : memref<8x1xf32, #tpu.memory_space<vmem>>, vector<8x1xf32>
    tpu.vector_store %arg6[%c0_13, %c0_14], %28 {strides = array<i32>} : memref<8x1xf32, #tpu.memory_space<vmem>>, vector<8x1xf32>,
    %c2_i32 = arith.constant 2 : i32
    %30 = arith.cmpi eq, %arg1, %c2_i32 : i32
    %31 = arith.extui %30 : i1 to i32
    %c0_i32_15 = arith.constant 0 : i32
    %32 = arith.cmpi ne, %31, %c0_i32_15 : i32
    scf.if %32 {
      %c0_16 = arith.constant 0 : index
      %c0_17 = arith.constant 0 : index
      %33 = vector.load %arg5[%c0_16, %c0_17] : memref<8x1xf32, #tpu.memory_space<vmem>>, vector<8x1xf32>
      %c0_18 = arith.constant 0 : index
      %c0_19 = arith.constant 0 : index
      %34 = vector.load %arg6[%c0_18, %c0_19] : memref<8x1xf32, #tpu.memory_space<vmem>>, vector<8x1xf32>
      %35 = arith.divf %33, %34 : vector<8x1xf32>
      %c0_20 = arith.constant 0 : index
      %c0_21 = arith.constant 0 : index
      %36 = vector.load %arg4[%c0_20, %c0_21] : memref<8x1xf32, #tpu.memory_space<vmem>>, vector<8x1xf32>
      tpu.vector_store %arg4[%c0_20, %c0_21], %35 {strides = array<i32>} : memref<8x1xf32, #tpu.memory_space<vmem>>, vector<8x1xf32>,
    } else {
    }
    return
  }
  func.func @transform_0(%arg0: i32, %arg1: i32) -> (i32, i32) {
    %c0_i32 = arith.constant 0 : i32
    return %arg0, %arg1 : i32, i32
  }
  func.func @transform_1(%arg0: i32, %arg1: i32) -> (i32, i32) {
    %c0_i32 = arith.constant 0 : i32
    return %arg0, %arg1 : i32, i32
  }
  func.func @transform_2(%arg0: i32, %arg1: i32) -> (i32, i32) {
    %c0_i32 = arith.constant 0 : i32
    %c0_i32_0 = arith.constant 0 : i32
    return %arg0, %c0_i32 : i32, i32
  }
}

</mosaic_0001>

<llo_original>
// kernel: tpu_custom_call.1
$region0: #{tpu_custom_call.1}
  #allocation0 [shape = 'u32[]', space=smem, size = 0x4, offset = 0x4, fixed_abs, tag = 'smem constant byte address 0x4 - core index']
  #allocation1 [shape = 'u32[144,128]{1,0:T(1,128)}', space=vmem, size = 0x12000, scoped, tag = 'internal scratch']
  #allocation2 [shape = 'f32[8,1]{1,0:T(8,128)}', space=vmem, size = 0x1000, scoped, tag = 'scratch operand']
  #allocation3 [shape = 'f32[8,1]{1,0:T(8,128)}', space=vmem, size = 0x1000, scoped, tag = 'scratch operand']
  %s0 = inlined_call_operand.hbm [shape: f32[24,320], index: 0, kind: input, shape index: {}]
  %s1 = inlined_call_operand.hbm [shape: f32[24,320], index: 1, kind: input, shape index: {}]
  %s2 = inlined_call_operand.vmem [shape: f32[24,1], index: 2, kind: output, shape index: {}]
  %s3 = sld [smem:[#allocation0]]
  $region57: #{tpu_custom_call.1} parent=0
    _
  %s5 = ssub.s32 1, %s3
  %s6 = scalar_select 0, %s5, %s3
  $region1: #{tpu_custom_call.1} parent=0
    #allocation4 [shape = 'u8[8192]{0}', space=vmem, size = 0x2000, scoped, tag = 'input window, operand 0']
    #allocation5 [shape = 's32[2]{0}', space=sflag, size = 0x8, scoped, tag = 'scoped memory for tpu_custom_call.1']
    #allocation6 [shape = 'u8[8192]{0}', space=vmem, size = 0x2000, scoped, tag = 'input window, operand 1']
    #allocation7 [shape = 's32[2]{0}', space=sflag, size = 0x8, scoped, tag = 'scoped memory for tpu_custom_call.1']
    %7 = vsyncpa [#allocation5], 0
    %s8 = scalar_lea.sflag [#allocation5], 1
    %9 = vsyncpa %s8, 0
    %10 = vsyncpa [#allocation7], 0
    %s11 = scalar_lea.sflag [#allocation7], 1
    %12 = vsyncpa %s11, 0
    loop: start=0, step=1, limit=11
    $region2: #{tpu_custom_call.1} parent=1 // loop_pre_header
      _
    $region3: #{tpu_custom_call.1} parent=1 // loop_header
      %s14 = sphi 0, %s18
      %p15 = scmp.ge.s32.totalorder %s14, 11
      %s21 = sphi 0, %s33
      %s22 = sphi 0, %s29
      %s23 = sphi 0, %s21
      %s24 = sphi 0, %s22
      %s25 = sphi 0, %s23
      %s26 = sphi 0, %s24
      %s38 = sphi 0, %s40
      %s41 = sphi 0, %s38
      %s42 = sphi 0, %s41
      %s58 = sphi 0, %s42
      %s66 = sphi 0, %s68
      %s69 = sphi 0, %s66
      %s70 = sphi 0, %s69
      %s86 = sphi 0, %s70
      %s92 = sphi 0, %s94
      %s95 = sphi 0, %s92
      %s96 = sphi 0, %s95
      %s112 = sphi 0, %s96
    $region4: #{tpu_custom_call.1} parent=1 // loop_header_branch
      %17 = sbr.rel (%p15) target = $region8
    $region5: #{tpu_custom_call.1} parent=1 // loop_body
      %s19 = ssub.s32 %s14, 1
      %s20 = ssub.s32 %s14, 2
      %s27 = sadd.s32 1, %s22
      %p28 = scmp.ge.s32.totalorder %s27, 3
      %s29 = scalar_select %p28, 0, %s27
      %s30 = sadd.s32 1, %s21
      %s31 = scalar_select %p28, %s30, %s21
      %p32 = scmp.ge.s32.totalorder %s31, 3
      %s33 = scalar_select %p32, 0, %s31
      %s34 = ssub.s32 %s21, %s33
      %s35 = ssub.s32 %s22, %s29
      %s36 = sor.u32 %s34, %s35
      %p37 = scmp.eq.s32.totalorder %s36, 0
      %s39 = sadd.s32 %s38, 1
      %s40 = scalar_select %p37, %s38, %s39
      %p43 = pneg %p37
      %p44 = scmp.eq.s32.totalorder %s14, 8
      %p45 = por %p43, %p44
      %p46 = scmp.ne.s32.totalorder %s38, %s41
      %p47 = scmp.eq.s32.totalorder %s14, 0
      %p48 = por %p46, %p47
      %p49 = scmp.ne.s32.totalorder %s38, %s41
      %p50 = scmp.eq.s32.totalorder %s19, 8
      %p51 = por %p49, %p50
      %p52 = scmp.ne.s32.totalorder %s41, %s42
      %p53 = scmp.eq.s32.totalorder %s19, 0
      %p54 = por %p52, %p53
      %p55 = scmp.ne.s32.totalorder %s41, %s42
      %p56 = scmp.eq.s32.totalorder %s20, 8
      %p57 = por %p55, %p56
      %p59 = scmp.ne.s32.totalorder %s42, %s58
      %p60 = scmp.eq.s32.totalorder %s20, 0
      %p61 = por %p59, %p60
      %s62 = ssub.s32 %s21, %s33
      %s63 = ssub.s32 %s22, %s29
      %s64 = sor.u32 %s62, %s63
      %p65 = scmp.eq.s32.totalorder %s64, 0
      %s67 = sadd.s32 %s66, 1
      %s68 = scalar_select %p65, %s66, %s67
      %p71 = pneg %p65
      %p72 = scmp.eq.s32.totalorder %s14, 8
      %p73 = por %p71, %p72
      %p74 = scmp.ne.s32.totalorder %s66, %s69
      %p75 = scmp.eq.s32.totalorder %s14, 0
      %p76 = por %p74, %p75
      %p77 = scmp.ne.s32.totalorder %s66, %s69
      %p78 = scmp.eq.s32.totalorder %s19, 8
      %p79 = por %p77, %p78
      %p80 = scmp.ne.s32.totalorder %s69, %s70
      %p81 = scmp.eq.s32.totalorder %s19, 0
      %p82 = por %p80, %p81
      %p83 = scmp.ne.s32.totalorder %s69, %s70
      %p84 = scmp.eq.s32.totalorder %s20, 8
      %p85 = por %p83, %p84
      %p87 = scmp.ne.s32.totalorder %s70, %s86
      %p88 = scmp.eq.s32.totalorder %s20, 0
      %p89 = por %p87, %p88
      %s90 = ssub.s32 %s21, %s33
      %p91 = scmp.eq.s32.totalorder %s90, 0
      %s93 = sadd.s32 %s92, 1
      %s94 = scalar_select %p91, %s92, %s93
      %p97 = pneg %p91
      %p98 = scmp.eq.s32.totalorder %s14, 8
      %p99 = por %p97, %p98
      %p100 = scmp.ne.s32.totalorder %s92, %s95
      %p101 = scmp.eq.s32.totalorder %s14, 0
      %p102 = por %p100, %p101
      %p103 = scmp.ne.s32.totalorder %s92, %s95
      %p104 = scmp.eq.s32.totalorder %s19, 8
      %p105 = por %p103, %p104
      %p106 = scmp.ne.s32.totalorder %s95, %s96
      %p107 = scmp.eq.s32.totalorder %s19, 0
      %p108 = por %p106, %p107
      %p109 = scmp.ne.s32.totalorder %s95, %s96
      %p110 = scmp.eq.s32.totalorder %s20, 8
      %p111 = por %p109, %p110
      %p113 = scmp.ne.s32.totalorder %s96, %s112
      %p114 = scmp.eq.s32.totalorder %s20, 0
      %p115 = por %p113, %p114
      %p116 = scmp.le.s32.totalorder 1, %s14
      %p117 = scmp.lt.s32.totalorder %s14, 10
      %p118 = pnand %p116, %p117
      %p119 = pneg %p118
      // Predicated region
      $region9: #{tpu_custom_call.1} parent=5 // pred_check
        _
      $region10: #{tpu_custom_call.1} parent=5 // pred_check_branch
        %121 = sbr.rel (%p118) target = $region12
      $region11: #{tpu_custom_call.1} parent=5 // pred_region
        %s122 = ssub.s32 %s14, 1
      $region12: #{tpu_custom_call.1} parent=5 // pred_fallthru
        _
      %p123 = scmp.lt.s32.totalorder %s14, 9
      // Predicated region
      $region13: #{tpu_custom_call.1} parent=5 // pred_check
        %p124 = pneg %p123
      $region14: #{tpu_custom_call.1} parent=5 // pred_check_branch
        %126 = sbr.rel (%p124) target = $region16
      $region15: #{tpu_custom_call.1} parent=5 // pred_region
        // Predicated region
        $region17: #{tpu_custom_call.1} parent=15 // pred_check
          %p127 = pneg %p48
        $region18: #{tpu_custom_call.1} parent=15 // pred_check_branch
          %129 = sbr.rel (%p127) target = $region20
        $region19: #{tpu_custom_call.1} parent=15 // pred_region
          %s130 = sand.u32 %s38, 1
          %s131 = scalar_lea.sflag [#allocation5], %s130
          %s132 = sand.u32 %s38, 1
          %s133 = smul.addr %s132, 8
          %s134 = scalar_lea.vmem [#allocation4], %s133
          %s136 = ssub.s32 128, 128
          %137 = vsyncadd %s131, %s136
          %s138 = smul.addr %s21, 3
          %s139 = sadd.s32 %s22, %s138
          %s140 = smul.addr %s139, 128
          %s141 = scalar_lea.hbm %s0, %s140
          %s143 = sshll.u32 %s134, 4
          %s144 = int_to_ptr.vmem [resolvable:$true] %s143
          %146 = dma.hbm_to_vmem [thread:$0]  %s141, 128, %s144, %s131
        $region20: #{tpu_custom_call.1} parent=15 // pred_fallthru
          _
        // Predicated region
        $region21: #{tpu_custom_call.1} parent=15 // pred_check
          %p147 = pneg %p76
        $region22: #{tpu_custom_call.1} parent=15 // pred_check_branch
          %149 = sbr.rel (%p147) target = $region24
        $region23: #{tpu_custom_call.1} parent=15 // pred_region
          %s150 = sand.u32 %s66, 1
          %s151 = scalar_lea.sflag [#allocation7], %s150
          %s152 = sand.u32 %s66, 1
          %s153 = smul.addr %s152, 8
          %s154 = scalar_lea.vmem [#allocation6], %s153
          %s156 = ssub.s32 128, 128
          %157 = vsyncadd %s151, %s156
          %s158 = smul.addr %s21, 3
          %s159 = sadd.s32 %s22, %s158
          %s160 = smul.addr %s159, 128
          %s161 = scalar_lea.hbm %s1, %s160
          %s163 = sshll.u32 %s154, 4
          %s164 = int_to_ptr.vmem [resolvable:$true] %s163
          %166 = dma.hbm_to_vmem [thread:$0]  %s161, 128, %s164, %s151
        $region24: #{tpu_custom_call.1} parent=15 // pred_fallthru
          _
      $region16: #{tpu_custom_call.1} parent=5 // pred_fallthru
        _
      %p167 = scmp.le.s32.totalorder 1, %s14
      %p168 = scmp.lt.s32.totalorder %s14, 10
      %p169 = pnand %p167, %p168
      %p170 = pneg %p169
      // Predicated region
      $region25: #{tpu_custom_call.1} parent=5 // pred_check
        _
      $region26: #{tpu_custom_call.1} parent=5 // pred_check_branch
        %172 = sbr.rel (%p169) target = $region28
      $region27: #{tpu_custom_call.1} parent=5 // pred_region
        %s173 = ssub.s32 %s14, 1
        %s174 = sand.u32 %s41, 1
        %s175 = scalar_lea.sflag [#allocation5], %s174
        %s176 = sand.u32 %s41, 1
        %s177 = smul.addr %s176, 8
        %s178 = scalar_lea.vmem [#allocation4], %s177
        // Predicated region
        $region29: #{tpu_custom_call.1} parent=27 // pred_check
          %p179 = pneg %p54
        $region30: #{tpu_custom_call.1} parent=27 // pred_check_branch
          %181 = sbr.rel (%p179) target = $region32
        $region31: #{tpu_custom_call.1} parent=27 // pred_region
          %182 = dma.done %s175, 128
        $region32: #{tpu_custom_call.1} parent=27 // pred_fallthru
          _
        %s183 = sand.u32 %s69, 1
        %s184 = scalar_lea.sflag [#allocation7], %s183
        %s185 = sand.u32 %s69, 1
        %s186 = smul.addr %s185, 8
        %s187 = scalar_lea.vmem [#allocation6], %s186
        // Predicated region
        $region33: #{tpu_custom_call.1} parent=27 // pred_check
          %p188 = pneg %p82
        $region34: #{tpu_custom_call.1} parent=27 // pred_check_branch
          %190 = sbr.rel (%p188) target = $region36
        $region35: #{tpu_custom_call.1} parent=27 // pred_region
          %191 = dma.done %s184, 128
        $region36: #{tpu_custom_call.1} parent=27 // pred_fallthru
          _
        %s192 = sand.u32 %s41, 1
        %s193 = scalar_lea.sflag [#allocation5], %s192
        %s194 = sand.u32 %s41, 1
        %s195 = smul.addr %s194, 8
        %s196 = scalar_lea.vmem [#allocation4], %s195
        %p197 = pneg %p54
        %p198 = pneg %p51
        %s199 = sand.u32 %s69, 1
        %s200 = scalar_lea.sflag [#allocation7], %s199
        %s201 = sand.u32 %s69, 1
        %s202 = smul.addr %s201, 8
        %s203 = scalar_lea.vmem [#allocation6], %s202
        %p204 = pneg %p82
        %p205 = pneg %p79
        %p206 = pneg %p108
        %p207 = pneg %p105
        %p208 = scmp.lt.s32.totalorder %s23, 2
        %s209 = scalar_select %p208, %s23, 2
        %s210 = smul.addr %s209, 8
        %s211 = scalar_lea.vmem %s2, %s210
        %p212 = scmp.lt.s32.totalorder %s23, 2
        %s213 = scalar_select %p212, %s23, 2
        %s214 = smul.addr %s213, 8
        %s215 = scalar_lea.vmem %s2, %s214
        %p216 = scmp.eq.s32.totalorder %s24, 0
        // Predicated region
        $region37: #{tpu_custom_call.1} parent=27 // pred_check
          %p217 = pneg %p216
        $region38: #{tpu_custom_call.1} parent=27 // pred_check_branch
          %219 = sbr.rel (%p217) target = $region40
        $region39: #{tpu_custom_call.1} parent=27 // pred_region
          %vm220 = vcmask 7168
          %221 = vst.msk [vmem:[#allocation2] sm:$0xff] %vm220, 0.0
          %222 = vst.msk [vmem:[#allocation3] sm:$0xff] %vm220, 0.0
        $region40: #{tpu_custom_call.1} parent=27 // pred_fallthru
          _
        %v223 = vld [vmem:[%s178] sm:$0xff]
        %v224 = vld [vmem:[%s187] sm:$0xff]
        %vm225 = vcmp.ne.f32.partialorder %v224, -100.0
        %v226 = vlaneseq
        %v227 = vand.u32 %v226, 127
        %s228 = smul.u32 %s24, 128
        %v229 = vstv %s228
        %v230 = vadd.s32 %v227, %v229
        %vm231 = vcmp.lt.s32.totalorder %v230, 320
        %vm232 = vmand %vm225, %vm231
        %v233 = vsub.f32 %v223, %v224
        %v234 = vand.u32 2147483647, %v233
        %v235 = vsel %vm232, %v234, 0.0
        %v236 = vld [vmem:[#allocation2] sm:$0xff]
        %237 = vadd.xlane.f32.xlu0 %v235
        %v238 = vpop.xlane.xlu0 %237
        %v239 = vadd.f32 %v236, %v238
        %vm240 = vcmask 7168
        %241 = vst.msk [vmem:[#allocation2] sm:$0xff] %vm240, %v239
        %v242 = vld [vmem:[#allocation3] sm:$0xff]
        %v243 = vsel %vm232, 1, 0
        %v244 = vcvt.s32.f32 %v243
        %245 = vadd.xlane.f32.xlu0 %v244
        %v246 = vpop.xlane.xlu0 %245
        %v247 = vadd.f32 %v242, %v246
        %248 = vst.msk [vmem:[#allocation3] sm:$0xff] %vm240, %v247
        %p249 = scmp.eq.s32.totalorder %s24, 2
        // Predicated region
        $region41: #{tpu_custom_call.1} parent=27 // pred_check
          %p250 = pneg %p249
        $region42: #{tpu_custom_call.1} parent=27 // pred_check_branch
          %252 = sbr.rel (%p250) target = $region44
        $region43: #{tpu_custom_call.1} parent=27 // pred_region
          %v253 = vld [vmem:[#allocation2] sm:$0xff]
          %v254 = vld [vmem:[#allocation3] sm:$0xff]
          %v255 = vrcp.pop %v254
          %v256 = vmul.f32 %v253, %v255
          %257 = vst.msk [vmem:[%s215] sm:$0xff] %vm240, %v256
        $region44: #{tpu_custom_call.1} parent=27 // pred_fallthru
          _
        %p258 = scmp.lt.s32.totalorder %s23, 2
        %s259 = scalar_select %p258, %s23, 2
        %s260 = smul.addr %s259, 8
        %s261 = scalar_lea.vmem %s2, %s260
        // Predicated region
        $region45: #{tpu_custom_call.1} parent=27 // pred_check
          %p262 = pneg %p105
        $region46: #{tpu_custom_call.1} parent=27 // pred_check_branch
          %264 = sbr.rel (%p262) target = $region48
        $region47: #{tpu_custom_call.1} parent=27 // pred_region
          _
        $region48: #{tpu_custom_call.1} parent=27 // pred_fallthru
          _
      $region28: #{tpu_custom_call.1} parent=5 // pred_fallthru
        _
      %p265 = scmp.le.s32.totalorder 2, %s14
      // Predicated region
      $region49: #{tpu_custom_call.1} parent=5 // pred_check
        %p266 = pneg %p265
      $region50: #{tpu_custom_call.1} parent=5 // pred_check_branch
        %268 = sbr.rel (%p266) target = $region52
      $region51: #{tpu_custom_call.1} parent=5 // pred_region
        %s269 = ssub.s32 %s14, 2
        // Predicated region
        $region53: #{tpu_custom_call.1} parent=51 // pred_check
          %p270 = pneg %p111
        $region54: #{tpu_custom_call.1} parent=51 // pred_check_branch
          %272 = sbr.rel (%p270) target = $region56
        $region55: #{tpu_custom_call.1} parent=51 // pred_region
          %p273 = scmp.lt.s32.totalorder %s25, 2
          %s274 = scalar_select %p273, %s25, 2
          %s275 = smul.addr %s274, 8
          %s276 = scalar_lea.vmem %s2, %s275
        $region56: #{tpu_custom_call.1} parent=51 // pred_fallthru
          _
      $region52: #{tpu_custom_call.1} parent=5 // pred_fallthru
        _
    $region6: #{tpu_custom_call.1} parent=1 // loop_footer
      %s18 = sadd.s32 1, %s14
    $region7: #{tpu_custom_call.1} parent=1 // loop_footer_branch
      %13 = sbr.rel target = $region3
    $region8: #{tpu_custom_call.1} parent=1 // loop_exit
      _
    %277 = vsyncpa [#allocation5], 1
    %s278 = scalar_lea.sflag [#allocation5], 1
    %279 = vsyncpa %s278, 1
    %280 = vsyncpa [#allocation7], 1
    %s281 = scalar_lea.sflag [#allocation7], 1
    %282 = vsyncpa %s281, 1

</llo_original>
